<compile_context>
chip_gen: v7x
topology: tpu7x:2x2x1
jax: 0.10.0
libtpu: 0.0.40
codegen_flags: <defaults>
</compile_context>

<pallas_src>
import math
import functools

import jax
import jax.numpy as jnp
from jax.experimental import pallas as pl
from jax.experimental.pallas import tpu as pltpu


# ---------------------------------------------------------------------------
# Prologue: key / value 1x1-conv projections -> head-split bf16 layout in HBM.
# ---------------------------------------------------------------------------
def _kv_proj_kernel(xk_ref, xv_ref, wk_ref, bk_ref, wv_ref, bv_ref,
                    k_out_ref, v_out_ref, *, num_heads, head_dim):
    """One (batch, kv-tile) grid step.

    xk_ref/xv_ref : (1, d_model, TILE_KV) f32   raw key / value tile
    wk/wv         : (d_model, d_model)    bf16  head-permuted 1x1-conv weights
    bk/bv         : (d_model, 1)          f32   biases
    k_out/v_out   : (1, H, head_dim, TILE_KV) bf16
    """
    tile_n = xk_ref.shape[-1]
    xk = xk_ref[0].astype(jnp.bfloat16)    # in-kernel cast: cheap VPU pack, no
    xv = xv_ref[0].astype(jnp.bfloat16)    # extra HBM pass in the wrapper
    k = jnp.dot(wk_ref[...], xk, preferred_element_type=jnp.float32) + bk_ref[...]
    v = jnp.dot(wv_ref[...], xv, preferred_element_type=jnp.float32) + bv_ref[...]
    k_out_ref[0] = k.reshape(num_heads, head_dim, tile_n).astype(k_out_ref.dtype)
    v_out_ref[0] = v.reshape(num_heads, head_dim, tile_n).astype(v_out_ref.dtype)


# ---------------------------------------------------------------------------
# Main: fused Q projection + flash attention (online softmax) + merge conv.
# ---------------------------------------------------------------------------
def _flash_attn_kernel(xq_ref, k_ref, v_ref, wq_ref, bq_ref, wm_ref, bm_ref,
                       o_ref, q_sc, m_sc, l_sc, acc_sc,
                       *, num_heads, head_dim):
    """One (batch, q-tile, kv-tile) grid step.

    xq_ref : (1, d_model, TILE_Q)        f32   raw query tile
    k/v    : (1, H, head_dim, TILE_KV)   bf16  projected key / value chunk
    wq/wm  : (d_model, d_model)          bf16  (wq has 1/sqrt(hd) folded in)
    bq/bm  : (d_model, 1)                f32
    o_ref  : (1, d_model, TILE_Q)              output tile (written at last kv)
    q_sc   : VMEM (H, head_dim, TILE_Q)  bf16  projected Q, reused across kv
    m_sc/l_sc : VMEM (H, 1, TILE_Q)      f32   running max / running denom
    acc_sc : VMEM (H, head_dim, TILE_Q)  f32   running context accumulator
    """
    ki = pl.program_id(2)
    tile_q = xq_ref.shape[-1]

    @pl.when(ki == 0)
    def _():
        # Q projection for this (batch, q-tile); attention scale is pre-folded
        # into wq/bq by the wrapper.  Stored bf16 + head-split for all kv steps.
        xq = xq_ref[0].astype(jnp.bfloat16)
        q = jnp.dot(wq_ref[...], xq, preferred_element_type=jnp.float32) + bq_ref[...]
        q_sc[...] = q.reshape(num_heads, head_dim, tile_q).astype(jnp.bfloat16)
        m_sc[...] = jnp.full(m_sc.shape, -jnp.inf, m_sc.dtype)
        l_sc[...] = jnp.zeros(l_sc.shape, l_sc.dtype)
        acc_sc[...] = jnp.zeros(acc_sc.shape, acc_sc.dtype)

    kh = k_ref[0]            # (H, head_dim, TILE_KV) bf16
    vh = v_ref[0]            # (H, head_dim, TILE_KV) bf16
    qh = q_sc[...]           # (H, head_dim, TILE_Q)  bf16

    # scores[h, k, q] = sum_d kh[h,d,k] * qh[h,d,q]   (bf16 MXU, f32 accumulate)
    # Using the (H, TILE_KV, TILE_Q) layout keeps the softmax statistics in a
    # (H, 1, TILE_Q) lane-aligned layout -> no transposes in the update below.
    s = jnp.einsum('hdk,hdq->hkq', kh, qh,
                   preferred_element_type=jnp.float32)           # (H, TK, TQ)

    # Online softmax update (all f32 on the VPU/EUP).
    m_prev = m_sc[...]
    m_new = jnp.maximum(m_prev, jnp.max(s, axis=1, keepdims=True))   # (H,1,TQ)
    alpha = jnp.exp(m_prev - m_new)
    p = jnp.exp(s - m_new)                                           # (H,TK,TQ)
    l_sc[...] = alpha * l_sc[...] + jnp.sum(p, axis=1, keepdims=True)

    # ctx[h, d, q] = sum_k vh[h,d,k] * p[h,k,q]   (bf16 MXU, f32 accumulate)
    ctx = jnp.einsum('hdk,hkq->hdq', vh, p.astype(jnp.bfloat16),
                     preferred_element_type=jnp.float32)             # (H,hd,TQ)
    acc_sc[...] = alpha * acc_sc[...] + ctx
    m_sc[...] = m_new

    @pl.when(ki == pl.num_programs(2) - 1)
    def _():
        inv_l = pl.reciprocal(l_sc[...], approx=True)                # EUP slot
        x_all = (acc_sc[...] * inv_l).reshape(num_heads * head_dim, tile_q)
        out = (jnp.dot(wm_ref[...], x_all.astype(jnp.bfloat16),
                       preferred_element_type=jnp.float32) + bm_ref[...])
        o_ref[0] = out.astype(o_ref.dtype)


def _vmem_limit(per_step_bytes):
    """2x for double-buffering + 2x headroom, clamped to [16 MiB, 64 MiB]."""
    need = 4 * per_step_bytes
    return int(min(64 * 1024 * 1024, max(16 * 1024 * 1024, need)))


def multi_headed_attention(query, key, value, params, num_heads, *,
                           tile_q=128, tile_kv=128):
    """Forward pass of the PyTorch MultiHeadedAttention module.

    query/key/value : (B, d_model, N) arrays (Conv1d NCL layout).
    params = (wq, bq, wk, bk, wv, bv, wm, bm); w* are (d_model, d_model), b* (d_model,).
    tile_q / tile_kv: 128 is matched to the v5e MXU; use 256 on v6e / v7x
    (2x256x256 MXUs) when N is a multiple of 256.
    """
    wq, bq, wk, bk, wv, bv, wm, bm = params
    B, d_model, N = query.shape
    assert d_model % num_heads == 0
    head_dim = d_model // num_heads
    assert head_dim % 8 == 0, \
        "head_dim must be a multiple of 8 (sublane granularity); >=16 preferred for bf16"

    tile_q = min(tile_q, N)
    tile_kv = min(tile_kv, N)
    assert N % tile_q == 0 and N % tile_kv == 0, \
        "N must be a multiple of the tile sizes (pad upstream)"
    n_q = N // tile_q
    n_kv = N // tile_kv

    bf16, f32 = jnp.bfloat16, jnp.float32

    # PyTorch's .view(B, dim, H, N) maps channel c = d*H + h to (d, h).  Row p of
    # the permuted projection weight (p = h*head_dim + d) must therefore produce
    # original channel d*num_heads + h, so heads are contiguous row blocks inside
    # the kernels; wm's columns are permuted to consume that order.
    p = jnp.arange(d_model)
    perm = (p % head_dim) * num_heads + (p // head_dim)

    scale = 1.0 / math.sqrt(head_dim)            # attention scale folded into Q
    wq_p = (wq * scale)[perm, :].astype(bf16)
    bq_p = (bq * scale)[perm][:, None].astype(f32)
    wk_p = wk[perm, :].astype(bf16)
    bk_p = bk[perm][:, None].astype(f32)
    wv_p = wv[perm, :].astype(bf16)
    bv_p = bv[perm][:, None].astype(f32)
    wm_p = wm[:, perm].astype(bf16)
    bm_p = bm[:, None].astype(f32)

    # Constant index_maps -> each weight/bias block is DMA'd only once.  On
    # VMEM-tight configs (v7x), pipeline_mode=pl.Buffered(1) here would also drop
    # the unused second pipeline buffer for these constant blocks.
    w_spec = pl.BlockSpec((d_model, d_model), lambda *idx: (0, 0))
    b_spec = pl.BlockSpec((d_model, 1), lambda *idx: (0, 0))

    # ---- 1) key / value projections -> (B, H, head_dim, N) bf16 in HBM ------
    kv_vmem = _vmem_limit(
        2 * d_model * tile_kv * 4          # xk + xv f32 blocks
        + 2 * d_model * d_model * 2        # wk + wv bf16
        + 2 * d_model * 4                  # biases
        + 2 * d_model * tile_kv * 2)       # k_out + v_out bf16 blocks
    k_heads, v_heads = pl.pallas_call(
        functools.partial(_kv_proj_kernel, num_heads=num_heads, head_dim=head_dim),
        out_shape=(jax.ShapeDtypeStruct((B, num_heads, head_dim, N), bf16),
                   jax.ShapeDtypeStruct((B, num_heads, head_dim, N), bf16)),
        grid=(B, n_kv),
        in_specs=[pl.BlockSpec((1, d_model, tile_kv), lambda b, ni: (b, 0, ni)),
                  pl.BlockSpec((1, d_model, tile_kv), lambda b, ni: (b, 0, ni)),
                  w_spec, b_spec, w_spec, b_spec],
        out_specs=(pl.BlockSpec((1, num_heads, head_dim, tile_kv),
                                lambda b, ni: (b, 0, 0, ni)),
                   pl.BlockSpec((1, num_heads, head_dim, tile_kv),
                                lambda b, ni: (b, 0, 0, ni))),
        compiler_params=pltpu.CompilerParams(
            dimension_semantics=("parallel", "parallel"),
            vmem_limit_bytes=kv_vmem),
    )(key, value, wk_p, bk_p, wv_p, bv_p)

    # ---- 2) fused Q projection + flash attention + merge --------------------
    out_itemsize = jnp.dtype(query.dtype).itemsize
    attn_vmem = _vmem_limit(
        d_model * tile_q * 4                    # xq f32 block
        + 2 * d_model * tile_kv * 2             # k + v bf16 blocks
        + 2 * d_model * d_model * 2             # wq + wm bf16
        + 2 * d_model * 4                       # biases
        + d_model * tile_q * out_itemsize       # output block
        + d_model * tile_q * (2 + 4)            # q_sc (bf16) + acc_sc (f32)
        + 2 * num_heads * tile_q * 4            # m_sc + l_sc
        + 2 * num_heads * tile_kv * tile_q * 4)  # scores / probs temporaries

    out = pl.pallas_call(
        functools.partial(_flash_attn_kernel, num_heads=num_heads, head_dim=head_dim),
        out_shape=jax.ShapeDtypeStruct((B, d_model, N), query.dtype),
        grid=(B, n_q, n_kv),
        in_specs=[
            pl.BlockSpec((1, d_model, tile_q), lambda b, qi, ki: (b, 0, qi)),
            pl.BlockSpec((1, num_heads, head_dim, tile_kv),
                         lambda b, qi, ki: (b, 0, 0, ki)),
            pl.BlockSpec((1, num_heads, head_dim, tile_kv),
                         lambda b, qi, ki: (b, 0, 0, ki)),
            w_spec, b_spec, w_spec, b_spec],
        out_specs=pl.BlockSpec((1, d_model, tile_q), lambda b, qi, ki: (b, 0, qi)),
        scratch_shapes=[pltpu.VMEM((num_heads, head_dim, tile_q), bf16),   # Q
                        pltpu.VMEM((num_heads, 1, tile_q), f32),           # running max
                        pltpu.VMEM((num_heads, 1, tile_q), f32),           # running denom
                        pltpu.VMEM((num_heads, head_dim, tile_q), f32)],   # running ctx
        compiler_params=pltpu.CompilerParams(
            # batch and query-tile axes shard across TensorCores (megacore /
            # v7x 2-TC); the KV axis is the online-softmax reduction.
            dimension_semantics=("parallel", "parallel", "arbitrary"),
            vmem_limit_bytes=attn_vmem),
    )(query, k_heads, v_heads, wq_p, bq_p, wm_p, bm_p)
    return out


def reference(query, key, value, params, num_heads):
    """Pure-JAX replica of the PyTorch forward (for correctness check)."""
    wq, bq, wk, bk, wv, bv, wm, bm = params

    def conv1x1(w, b, x):
        return jnp.einsum('oi,bin->bon', w, x) + b[None, :, None]

    B, d_model, N = query.shape
    dim = d_model // num_heads
    q = conv1x1(wq, bq, query).reshape(B, dim, num_heads, N)
    k = conv1x1(wk, bk, key).reshape(B, dim, num_heads, N)
    v = conv1x1(wv, bv, value).reshape(B, dim, num_heads, N)
    scores = jnp.einsum('bdhn,bdhm->bhnm', q, k) / (dim ** 0.5)
    prob = jax.nn.softmax(scores, axis=-1)
    x = jnp.einsum('bhnm,bdhm->bdhn', prob, v)
    return conv1x1(wm, bm, x.reshape(B, d_model, N))


if __name__ == "__main__":
    # Small but MXU/lane-friendly shapes: head_dim = 16 (clean bf16 head split),
    # N = 512 -> grids (2, 4) and (2, 4, 4).
    B, d_model, num_heads, N = 2, 64, 4, 512

    key0 = jax.random.PRNGKey(0)
    ks = jax.random.split(key0, 16)

    # Deterministic synthetic parameters (Conv1d kernel_size=1 => 2-D weight).
    def w_init(k):
        return 0.1 * jax.random.normal(k, (d_model, d_model), jnp.float32)

    def b_init(k):
        return 0.1 * jax.random.normal(k, (d_model,), jnp.float32)

    params = (w_init(ks[0]), b_init(ks[1]),   # proj[0] (query)
              w_init(ks[2]), b_init(ks[3]),   # proj[1] (key)
              w_init(ks[4]), b_init(ks[5]),   # proj[2] (value)
              w_init(ks[6]), b_init(ks[7]))   # merge

    query = jax.random.normal(ks[8], (B, d_model, N), jnp.float32)
    key_ = jax.random.normal(ks[9], (B, d_model, N), jnp.float32)
    value = jax.random.normal(ks[10], (B, d_model, N), jnp.float32)

    out = multi_headed_attention(query, key_, value, params, num_heads)
    out = jax.block_until_ready(out)
    assert out.shape == (B, d_model, N)

    # Check against a reference computed with bf16-rounded weights/activations
    # (matches the kernel's MXU input precision; softmax + accumulation are f32
    # in both paths).
    def rb(x):
        return x.astype(jnp.bfloat16).astype(jnp.float32)

    params_q = (rb(params[0]), params[1], rb(params[2]), params[3],
                rb(params[4]), params[5], rb(params[6]), params[7])
    ref_q = reference(rb(query), rb(key_), rb(value), params_q, num_heads)
    assert jnp.allclose(out, ref_q, rtol=3e-2, atol=3e-2), \
        "mismatch vs bf16-rounded reference"

    # Sanity check against the full-f32 reference (loose: bf16 input rounding).
    ref_f32 = reference(query, key_, value, params, num_heads)
    assert jnp.allclose(out, ref_f32, rtol=1.5e-1, atol=1.5e-1), \
        "mismatch vs f32 reference"

    print("KERNEL_OK")
</pallas_src>

<mosaic_0001>
module attributes {stable_mosaic.version = 11 : i64} {
  func.func @_kv_proj_kernel(%arg0: i32, %arg1: i32, %arg2: memref<1x64x128xf32, #tpu.memory_space<vmem>>, %arg3: memref<1x64x128xf32, #tpu.memory_space<vmem>>, %arg4: memref<64x64xbf16, #tpu.memory_space<vmem>>, %arg5: memref<64x1xf32, #tpu.memory_space<vmem>>, %arg6: memref<64x64xbf16, #tpu.memory_space<vmem>>, %arg7: memref<64x1xf32, #tpu.memory_space<vmem>>, %arg8: memref<1x4x16x128xbf16, #tpu.memory_space<vmem>>, %arg9: memref<1x4x16x128xbf16, #tpu.memory_space<vmem>>) attributes {dimension_semantics = [#tpu.dimension_semantics<parallel>, #tpu.dimension_semantics<parallel>], iteration_bounds = array<i64: 2, 4>, scalar_prefetch = 0 : i64, scratch_operands = 0 : i64, tpu.core_type = #tpu.core_type<tc>, window_params = [{transform_indices = @transform_0, window_bounds = array<i64: 1, 64, 128>}, {transform_indices = @transform_1, window_bounds = array<i64: 1, 64, 128>}, {pipeline_mode = #tpu.pipeline_mode<synchronous>, transform_indices = @transform_2, window_bounds = array<i64: 64, 64>}, {pipeline_mode = #tpu.pipeline_mode<synchronous>, transform_indices = @transform_3, window_bounds = array<i64: 64, 1>}, {pipeline_mode = #tpu.pipeline_mode<synchronous>, transform_indices = @transform_4, window_bounds = array<i64: 64, 64>}, {pipeline_mode = #tpu.pipeline_mode<synchronous>, transform_indices = @transform_5, window_bounds = array<i64: 64, 1>}, {transform_indices = @transform_6, window_bounds = array<i64: 1, 4, 16, 128>}, {transform_indices = @transform_7, window_bounds = array<i64: 1, 4, 16, 128>}]} {
    %c0 = arith.constant 0 : index
    %c0_0 = arith.constant 0 : index
    %c0_1 = arith.constant 0 : index
    %0 = vector.load %arg2[%c0, %c0_0, %c0_1] : memref<1x64x128xf32, #tpu.memory_space<vmem>>, vector<1x64x128xf32>
    %1 = vector.shape_cast %0 : vector<1x64x128xf32> to vector<64x128xf32>
    %2 = arith.truncf %1 : vector<64x128xf32> to vector<64x128xbf16>
    %c0_2 = arith.constant 0 : index
    %c0_3 = arith.constant 0 : index
    %c0_4 = arith.constant 0 : index
    %3 = vector.load %arg3[%c0_2, %c0_3, %c0_4] : memref<1x64x128xf32, #tpu.memory_space<vmem>>, vector<1x64x128xf32>
    %4 = vector.shape_cast %3 : vector<1x64x128xf32> to vector<64x128xf32>
    %5 = arith.truncf %4 : vector<64x128xf32> to vector<64x128xbf16>
    %c0_5 = arith.constant 0 : index
    %c0_6 = arith.constant 0 : index
    %6 = vector.load %arg4[%c0_5, %c0_6] : memref<64x64xbf16, #tpu.memory_space<vmem>>, vector<64x64xbf16>
    %cst = arith.constant dense<0.000000e+00> : vector<64x128xf32>
    %7 = tpu.matmul %6, %2, %cst {dimension_numbers = #tpu.dot_dimension_numbers<[1], [0], [0], [1], [0, 0, 1, 1], [], []>} : vector<64x64xbf16>, vector<64x128xbf16>, vector<64x128xf32> -> vector<64x128xf32>
    %c0_7 = arith.constant 0 : index
    %c0_8 = arith.constant 0 : index
    %8 = vector.load %arg5[%c0_7, %c0_8] : memref<64x1xf32, #tpu.memory_space<vmem>>, vector<64x1xf32>
    %9 = vector.broadcast %8 : vector<64x1xf32> to vector<64x128xf32>
    %10 = arith.addf %7, %9 : vector<64x128xf32>
    %c0_9 = arith.constant 0 : index
    %c0_10 = arith.constant 0 : index
    %11 = vector.load %arg6[%c0_9, %c0_10] : memref<64x64xbf16, #tpu.memory_space<vmem>>, vector<64x64xbf16>
    %cst_11 = arith.constant dense<0.000000e+00> : vector<64x128xf32>
    %12 = tpu.matmul %11, %5, %cst_11 {dimension_numbers = #tpu.dot_dimension_numbers<[1], [0], [0], [1], [0, 0, 1, 1], [], []>} : vector<64x64xbf16>, vector<64x128xbf16>, vector<64x128xf32> -> vector<64x128xf32>
    %c0_12 = arith.constant 0 : index
    %c0_13 = arith.constant 0 : index
    %13 = vector.load %arg7[%c0_12, %c0_13] : memref<64x1xf32, #tpu.memory_space<vmem>>, vector<64x1xf32>
    %14 = vector.broadcast %13 : vector<64x1xf32> to vector<64x128xf32>
    %15 = arith.addf %12, %14 : vector<64x128xf32>
    %16 = vector.shape_cast %10 : vector<64x128xf32> to vector<4x16x128xf32>
    %17 = arith.truncf %16 : vector<4x16x128xf32> to vector<4x16x128xbf16>
    %c0_14 = arith.constant 0 : index
    %c0_15 = arith.constant 0 : index
    %c0_16 = arith.constant 0 : index
    %c0_17 = arith.constant 0 : index
    %18 = vector.load %arg8[%c0_14, %c0_15, %c0_16, %c0_17] : memref<1x4x16x128xbf16, #tpu.memory_space<vmem>>, vector<1x4x16x128xbf16>
    %19 = vector.shape_cast %18 : vector<1x4x16x128xbf16> to vector<4x16x128xbf16>
    %20 = vector.shape_cast %17 : vector<4x16x128xbf16> to vector<1x4x16x128xbf16>
    tpu.vector_store %arg8[%c0_14, %c0_15, %c0_16, %c0_17], %20 {strides = array<i32>} : memref<1x4x16x128xbf16, #tpu.memory_space<vmem>>, vector<1x4x16x128xbf16>,
    %21 = vector.shape_cast %15 : vector<64x128xf32> to vector<4x16x128xf32>
    %22 = arith.truncf %21 : vector<4x16x128xf32> to vector<4x16x128xbf16>
    %c0_18 = arith.constant 0 : index
    %c0_19 = arith.constant 0 : index
    %c0_20 = arith.constant 0 : index
    %c0_21 = arith.constant 0 : index
    %23 = vector.load %arg9[%c0_18, %c0_19, %c0_20, %c0_21] : memref<1x4x16x128xbf16, #tpu.memory_space<vmem>>, vector<1x4x16x128xbf16>
    %24 = vector.shape_cast %23 : vector<1x4x16x128xbf16> to vector<4x16x128xbf16>
    %25 = vector.shape_cast %22 : vector<4x16x128xbf16> to vector<1x4x16x128xbf16>
    tpu.vector_store %arg9[%c0_18, %c0_19, %c0_20, %c0_21], %25 {strides = array<i32>} : memref<1x4x16x128xbf16, #tpu.memory_space<vmem>>, vector<1x4x16x128xbf16>,
    return
  }
  func.func @transform_0(%arg0: i32, %arg1: i32) -> (i32, i32, i32) {
    %c0_i32 = arith.constant 0 : i32
    %c0_i32_0 = arith.constant 0 : i32
    return %arg0, %c0_i32, %arg1 : i32, i32, i32
  }
  func.func @transform_1(%arg0: i32, %arg1: i32) -> (i32, i32, i32) {
    %c0_i32 = arith.constant 0 : i32
    %c0_i32_0 = arith.constant 0 : i32
    return %arg0, %c0_i32, %arg1 : i32, i32, i32
  }
  func.func @transform_2(%arg0: i32, %arg1: i32) -> (i32, i32) {
    %c0_i32 = arith.constant 0 : i32
    %c0_i32_0 = arith.constant 0 : i32
    %c0_i32_1 = arith.constant 0 : i32
    return %c0_i32, %c0_i32_0 : i32, i32
  }
  func.func @transform_3(%arg0: i32, %arg1: i32) -> (i32, i32) {
    %c0_i32 = arith.constant 0 : i32
    %c0_i32_0 = arith.constant 0 : i32
    %c0_i32_1 = arith.constant 0 : i32
    return %c0_i32, %c0_i32_0 : i32, i32
  }
  func.func @transform_4(%arg0: i32, %arg1: i32) -> (i32, i32) {
    %c0_i32 = arith.constant 0 : i32
    %c0_i32_0 = arith.constant 0 : i32
    %c0_i32_1 = arith.constant 0 : i32
    return %c0_i32, %c0_i32_0 : i32, i32
  }
  func.func @transform_5(%arg0: i32, %arg1: i32) -> (i32, i32) {
    %c0_i32 = arith.constant 0 : i32
    %c0_i32_0 = arith.constant 0 : i32
    %c0_i32_1 = arith.constant 0 : i32
    return %c0_i32, %c0_i32_0 : i32, i32
  }
  func.func @transform_6(%arg0: i32, %arg1: i32) -> (i32, i32, i32, i32) {
    %c0_i32 = arith.constant 0 : i32
    %c0_i32_0 = arith.constant 0 : i32
    %c0_i32_1 = arith.constant 0 : i32
    return %arg0, %c0_i32, %c0_i32_0, %arg1 : i32, i32, i32, i32
  }
  func.func @transform_7(%arg0: i32, %arg1: i32) -> (i32, i32, i32, i32) {
    %c0_i32 = arith.constant 0 : i32
    %c0_i32_0 = arith.constant 0 : i32
    %c0_i32_1 = arith.constant 0 : i32
    return %arg0, %c0_i32, %c0_i32_0, %arg1 : i32, i32, i32, i32
  }
}

</mosaic_0001>

<llo_original>
// kernel: tpu_custom_call.1
$region0: #{tpu_custom_call.1}
  #allocation0 [shape = 'u32[]', space=smem, size = 0x4, offset = 0x4, fixed_abs, tag = 'smem constant byte address 0x4 - core index']
  #allocation1 [shape = 'u32[144,128]{1,0:T(1,128)}', space=vmem, size = 0x12000, scoped, tag = 'internal scratch']
  %s0 = inlined_call_operand.hbm [shape: f32[2,64,512], index: 0, kind: input, shape index: {}]
  %s1 = inlined_call_operand.hbm [shape: f32[2,64,512], index: 1, kind: input, shape index: {}]
  %s2 = inlined_call_operand.vmem [shape: bf16[64,64], index: 2, kind: input, shape index: {}]
  %s3 = inlined_call_operand.vmem [shape: f32[64,1], index: 3, kind: input, shape index: {}]
  %s4 = inlined_call_operand.vmem [shape: bf16[64,64], index: 4, kind: input, shape index: {}]
  %s5 = inlined_call_operand.vmem [shape: f32[64,1], index: 5, kind: input, shape index: {}]
  %s6 = inlined_call_operand.hbm [shape: bf16[2,4,16,512], index: 6, kind: output, shape index: {0}]
  %s7 = inlined_call_operand.hbm [shape: bf16[2,4,16,512], index: 7, kind: output, shape index: {1}]
  %8 = xla_tuple %s6, %s7
  %s9 = sld [smem:[#allocation0]]
  $region73: #{tpu_custom_call.1} parent=0
    _
  %s11 = ssub.s32 1, %s9
  %s12 = scalar_select 0, %s11, %s9
  $region1: #{tpu_custom_call.1} parent=0
    #allocation2 [shape = 'u8[65536]{0}', space=vmem, size = 0x10000, scoped, tag = 'input window, operand 0']
    #allocation3 [shape = 's32[2]{0}', space=sflag, size = 0x8, scoped, tag = 'scoped memory for tpu_custom_call.1']
    #allocation4 [shape = 's32[2]{0}', space=sflag, size = 0x8, scoped, tag = 'scoped memory for tpu_custom_call.1']
    #allocation5 [shape = 'u8[65536]{0}', space=vmem, size = 0x10000, scoped, tag = 'input window, operand 1']
    #allocation6 [shape = 's32[2]{0}', space=sflag, size = 0x8, scoped, tag = 'scoped memory for tpu_custom_call.1']
    #allocation7 [shape = 'u8[32768]{0}', space=vmem, size = 0x8000, scoped, tag = 'output window, operand 0']
    #allocation8 [shape = 'u8[32768]{0}', space=vmem, size = 0x8000, scoped, tag = 'output window, operand 1']
    #allocation9 [shape = 's32[2]{0}', space=sflag, size = 0x8, scoped, tag = 'scoped memory for tpu_custom_call.1']
    %13 = vsyncpa [#allocation3], 0
    %s14 = scalar_lea.sflag [#allocation3], 1
    %15 = vsyncpa %s14, 0
    %16 = vsyncpa [#allocation6], 0
    %s17 = scalar_lea.sflag [#allocation6], 1
    %18 = vsyncpa %s17, 0
    %19 = vsyncpa [#allocation4], 0
    %s20 = scalar_lea.sflag [#allocation4], 1
    %21 = vsyncpa %s20, 0
    %22 = vsyncpa [#allocation9], 0
    %s23 = scalar_lea.sflag [#allocation9], 1
    %24 = vsyncpa %s23, 0
    loop: start=0, step=1, limit=10
    $region2: #{tpu_custom_call.1} parent=1 // loop_pre_header
      _
    $region3: #{tpu_custom_call.1} parent=1 // loop_header
      %s26 = sphi 0, %s30
      %p27 = scmp.ge.s32.totalorder %s26, 10
      %s33 = sphi 0, %s45
      %s34 = sphi 0, %s41
      %s35 = sphi 0, %s33
      %s36 = sphi 0, %s34
      %s37 = sphi 0, %s35
      %s38 = sphi 0, %s36
      %s50 = sphi 0, %s52
      %s53 = sphi 0, %s50
      %s54 = sphi 0, %s53
      %s70 = sphi 0, %s54
      %s78 = sphi 0, %s80
      %s81 = sphi 0, %s78
      %s82 = sphi 0, %s81
      %s98 = sphi 0, %s82
      %s102 = sphi 0, %s102
      %s104 = sphi 0, %s102
      %s105 = sphi 0, %s104
      %s119 = sphi 0, %s105
      %s123 = sphi 0, %s123
      %s125 = sphi 0, %s123
      %s126 = sphi 0, %s125
      %s140 = sphi 0, %s126
      %s144 = sphi 0, %s144
      %s146 = sphi 0, %s144
      %s147 = sphi 0, %s146
      %s161 = sphi 0, %s147
      %s165 = sphi 0, %s165
      %s167 = sphi 0, %s165
      %s168 = sphi 0, %s167
      %s182 = sphi 0, %s168
      %s190 = sphi 0, %s192
      %s193 = sphi 0, %s190
      %s194 = sphi 0, %s193
      %s210 = sphi 0, %s194
      %s218 = sphi 0, %s220
      %s221 = sphi 0, %s218
      %s222 = sphi 0, %s221
      %s238 = sphi 0, %s222
    $region4: #{tpu_custom_call.1} parent=1 // loop_header_branch
      %29 = sbr.rel (%p27) target = $region8
    $region5: #{tpu_custom_call.1} parent=1 // loop_body
      %s31 = ssub.s32 %s26, 1
      %s32 = ssub.s32 %s26, 2
      %s39 = sadd.s32 1, %s34
      %p40 = scmp.ge.s32.totalorder %s39, 4
      %s41 = scalar_select %p40, 0, %s39
      %s42 = sadd.s32 1, %s33
      %s43 = scalar_select %p40, %s42, %s33
      %p44 = scmp.ge.s32.totalorder %s43, 2
      %s45 = scalar_select %p44, 0, %s43
      %s46 = ssub.s32 %s33, %s45
      %s47 = ssub.s32 %s34, %s41
      %s48 = sor.u32 %s46, %s47
      %p49 = scmp.eq.s32.totalorder %s48, 0
      %s51 = sadd.s32 %s50, 1
      %s52 = scalar_select %p49, %s50, %s51
      %p55 = pneg %p49
      %p56 = scmp.eq.s32.totalorder %s26, 7
      %p57 = por %p55, %p56
      %p58 = scmp.ne.s32.totalorder %s50, %s53
      %p59 = scmp.eq.s32.totalorder %s26, 0
      %p60 = por %p58, %p59
      %p61 = scmp.ne.s32.totalorder %s50, %s53
      %p62 = scmp.eq.s32.totalorder %s31, 7
      %p63 = por %p61, %p62
      %p64 = scmp.ne.s32.totalorder %s53, %s54
      %p65 = scmp.eq.s32.totalorder %s31, 0
      %p66 = por %p64, %p65
      %p67 = scmp.ne.s32.totalorder %s53, %s54
      %p68 = scmp.eq.s32.totalorder %s32, 7
      %p69 = por %p67, %p68
      %p71 = scmp.ne.s32.totalorder %s54, %s70
      %p72 = scmp.eq.s32.totalorder %s32, 0
      %p73 = por %p71, %p72
      %s74 = ssub.s32 %s33, %s45
      %s75 = ssub.s32 %s34, %s41
      %s76 = sor.u32 %s74, %s75
      %p77 = scmp.eq.s32.totalorder %s76, 0
      %s79 = sadd.s32 %s78, 1
      %s80 = scalar_select %p77, %s78, %s79
      %p83 = pneg %p77
      %p84 = scmp.eq.s32.totalorder %s26, 7
      %p85 = por %p83, %p84
      %p86 = scmp.ne.s32.totalorder %s78, %s81
      %p87 = scmp.eq.s32.totalorder %s26, 0
      %p88 = por %p86, %p87
      %p89 = scmp.ne.s32.totalorder %s78, %s81
      %p90 = scmp.eq.s32.totalorder %s31, 7
      %p91 = por %p89, %p90
      %p92 = scmp.ne.s32.totalorder %s81, %s82
      %p93 = scmp.eq.s32.totalorder %s31, 0
      %p94 = por %p92, %p93
      %p95 = scmp.ne.s32.totalorder %s81, %s82
      %p96 = scmp.eq.s32.totalorder %s32, 7
      %p97 = por %p95, %p96
      %p99 = scmp.ne.s32.totalorder %s82, %s98
      %p100 = scmp.eq.s32.totalorder %s32, 0
      %p101 = por %p99, %p100
      %s103 = sadd.s32 %s102, 1
      %p106 = scmp.eq.s32.totalorder %s26, 7
      %p107 = scmp.ne.s32.totalorder %s102, %s104
      %p108 = scmp.eq.s32.totalorder %s26, 0
      %p109 = por %p107, %p108
      %p110 = scmp.ne.s32.totalorder %s102, %s104
      %p111 = scmp.eq.s32.totalorder %s31, 7
      %p112 = por %p110, %p111
      %p113 = scmp.ne.s32.totalorder %s104, %s105
      %p114 = scmp.eq.s32.totalorder %s31, 0
      %p115 = por %p113, %p114
      %p116 = scmp.ne.s32.totalorder %s104, %s105
      %p117 = scmp.eq.s32.totalorder %s32, 7
      %p118 = por %p116, %p117
      %p120 = scmp.ne.s32.totalorder %s105, %s119
      %p121 = scmp.eq.s32.totalorder %s32, 0
      %p122 = por %p120, %p121
      %s124 = sadd.s32 %s123, 1
      %p127 = scmp.eq.s32.totalorder %s26, 7
      %p128 = scmp.ne.s32.totalorder %s123, %s125
      %p129 = scmp.eq.s32.totalorder %s26, 0
      %p130 = por %p128, %p129
      %p131 = scmp.ne.s32.totalorder %s123, %s125
      %p132 = scmp.eq.s32.totalorder %s31, 7
      %p133 = por %p131, %p132
      %p134 = scmp.ne.s32.totalorder %s125, %s126
      %p135 = scmp.eq.s32.totalorder %s31, 0
      %p136 = por %p134, %p135
      %p137 = scmp.ne.s32.totalorder %s125, %s126
      %p138 = scmp.eq.s32.totalorder %s32, 7
      %p139 = por %p137, %p138
      %p141 = scmp.ne.s32.totalorder %s126, %s140
      %p142 = scmp.eq.s32.totalorder %s32, 0
      %p143 = por %p141, %p142
      %s145 = sadd.s32 %s144, 1
      %p148 = scmp.eq.s32.totalorder %s26, 7
      %p149 = scmp.ne.s32.totalorder %s144, %s146
      %p150 = scmp.eq.s32.totalorder %s26, 0
      %p151 = por %p149, %p150
      %p152 = scmp.ne.s32.totalorder %s144, %s146
      %p153 = scmp.eq.s32.totalorder %s31, 7
      %p154 = por %p152, %p153
      %p155 = scmp.ne.s32.totalorder %s146, %s147
      %p156 = scmp.eq.s32.totalorder %s31, 0
      %p157 = por %p155, %p156
      %p158 = scmp.ne.s32.totalorder %s146, %s147
      %p159 = scmp.eq.s32.totalorder %s32, 7
      %p160 = por %p158, %p159
      %p162 = scmp.ne.s32.totalorder %s147, %s161
      %p163 = scmp.eq.s32.totalorder %s32, 0
      %p164 = por %p162, %p163
      %s166 = sadd.s32 %s165, 1
      %p169 = scmp.eq.s32.totalorder %s26, 7
      %p170 = scmp.ne.s32.totalorder %s165, %s167
      %p171 = scmp.eq.s32.totalorder %s26, 0
      %p172 = por %p170, %p171
      %p173 = scmp.ne.s32.totalorder %s165, %s167
      %p174 = scmp.eq.s32.totalorder %s31, 7
      %p175 = por %p173, %p174
      %p176 = scmp.ne.s32.totalorder %s167, %s168
      %p177 = scmp.eq.s32.totalorder %s31, 0
      %p178 = por %p176, %p177
      %p179 = scmp.ne.s32.totalorder %s167, %s168
      %p180 = scmp.eq.s32.totalorder %s32, 7
      %p181 = por %p179, %p180
      %p183 = scmp.ne.s32.totalorder %s168, %s182
      %p184 = scmp.eq.s32.totalorder %s32, 0
      %p185 = por %p183, %p184
      %s186 = ssub.s32 %s33, %s45
      %s187 = ssub.s32 %s34, %s41
      %s188 = sor.u32 %s186, %s187
      %p189 = scmp.eq.s32.totalorder %s188, 0
      %s191 = sadd.s32 %s190, 1
      %s192 = scalar_select %p189, %s190, %s191
      %p195 = pneg %p189
      %p196 = scmp.eq.s32.totalorder %s26, 7
      %p197 = por %p195, %p196
      %p198 = scmp.ne.s32.totalorder %s190, %s193
      %p199 = scmp.eq.s32.totalorder %s26, 0
      %p200 = por %p198, %p199
      %p201 = scmp.ne.s32.totalorder %s190, %s193
      %p202 = scmp.eq.s32.totalorder %s31, 7
      %p203 = por %p201, %p202
      %p204 = scmp.ne.s32.totalorder %s193, %s194
      %p205 = scmp.eq.s32.totalorder %s31, 0
      %p206 = por %p204, %p205
      %p207 = scmp.ne.s32.totalorder %s193, %s194
      %p208 = scmp.eq.s32.totalorder %s32, 7
      %p209 = por %p207, %p208
      %p211 = scmp.ne.s32.totalorder %s194, %s210
      %p212 = scmp.eq.s32.totalorder %s32, 0
      %p213 = por %p211, %p212
      %s214 = ssub.s32 %s33, %s45
      %s215 = ssub.s32 %s34, %s41
      %s216 = sor.u32 %s214, %s215
      %p217 = scmp.eq.s32.totalorder %s216, 0
      %s219 = sadd.s32 %s218, 1
      %s220 = scalar_select %p217, %s218, %s219
      %p223 = pneg %p217
      %p224 = scmp.eq.s32.totalorder %s26, 7
      %p225 = por %p223, %p224
      %p226 = scmp.ne.s32.totalorder %s218, %s221
      %p227 = scmp.eq.s32.totalorder %s26, 0
      %p228 = por %p226, %p227
      %p229 = scmp.ne.s32.totalorder %s218, %s221
      %p230 = scmp.eq.s32.totalorder %s31, 7
      %p231 = por %p229, %p230
      %p232 = scmp.ne.s32.totalorder %s221, %s222
      %p233 = scmp.eq.s32.totalorder %s31, 0
      %p234 = por %p232, %p233
      %p235 = scmp.ne.s32.totalorder %s221, %s222
      %p236 = scmp.eq.s32.totalorder %s32, 7
      %p237 = por %p235, %p236
      %p239 = scmp.ne.s32.totalorder %s222, %s238
      %p240 = scmp.eq.s32.totalorder %s32, 0
      %p241 = por %p239, %p240
      %p242 = scmp.le.s32.totalorder 1, %s26
      %p243 = scmp.lt.s32.totalorder %s26, 9
      %p244 = pnand %p242, %p243
      %p245 = pneg %p244
      // Predicated region
      $region9: #{tpu_custom_call.1} parent=5 // pred_check
        _
      $region10: #{tpu_custom_call.1} parent=5 // pred_check_branch
        %247 = sbr.rel (%p244) target = $region12
      $region11: #{tpu_custom_call.1} parent=5 // pred_region
        %s248 = ssub.s32 %s26, 1
        // Predicated region
        $region13: #{tpu_custom_call.1} parent=11 // pred_check
          %p249 = pneg %p115
        $region14: #{tpu_custom_call.1} parent=11 // pred_check_branch
          %251 = sbr.rel (%p249) target = $region16
        $region15: #{tpu_custom_call.1} parent=11 // pred_region
          _
        $region16: #{tpu_custom_call.1} parent=11 // pred_fallthru
          _
        // Predicated region
        $region17: #{tpu_custom_call.1} parent=11 // pred_check
          %p252 = pneg %p136
        $region18: #{tpu_custom_call.1} parent=11 // pred_check_branch
          %254 = sbr.rel (%p252) target = $region20
        $region19: #{tpu_custom_call.1} parent=11 // pred_region
          _
        $region20: #{tpu_custom_call.1} parent=11 // pred_fallthru
          _
        // Predicated region
        $region21: #{tpu_custom_call.1} parent=11 // pred_check
          %p255 = pneg %p157
        $region22: #{tpu_custom_call.1} parent=11 // pred_check_branch
          %257 = sbr.rel (%p255) target = $region24
        $region23: #{tpu_custom_call.1} parent=11 // pred_region
          _
        $region24: #{tpu_custom_call.1} parent=11 // pred_fallthru
          _
        // Predicated region
        $region25: #{tpu_custom_call.1} parent=11 // pred_check
          %p258 = pneg %p178
        $region26: #{tpu_custom_call.1} parent=11 // pred_check_branch
          %260 = sbr.rel (%p258) target = $region28
        $region27: #{tpu_custom_call.1} parent=11 // pred_region
          _
        $region28: #{tpu_custom_call.1} parent=11 // pred_fallthru
          _
      $region12: #{tpu_custom_call.1} parent=5 // pred_fallthru
        _
      %p261 = scmp.lt.s32.totalorder %s26, 8
      // Predicated region
      $region29: #{tpu_custom_call.1} parent=5 // pred_check
        %p262 = pneg %p261
      $region30: #{tpu_custom_call.1} parent=5 // pred_check_branch
        %264 = sbr.rel (%p262) target = $region32
      $region31: #{tpu_custom_call.1} parent=5 // pred_region
        // Predicated region
        $region33: #{tpu_custom_call.1} parent=31 // pred_check
          %p265 = pneg %p60
        $region34: #{tpu_custom_call.1} parent=31 // pred_check_branch
          %267 = sbr.rel (%p265) target = $region36
        $region35: #{tpu_custom_call.1} parent=31 // pred_region
          %s268 = sand.u32 %s50, 1
          %s269 = scalar_lea.sflag [#allocation3], %s268
          %s270 = sand.u32 %s50, 1
          %s271 = smul.addr %s270, 64
          %s272 = scalar_lea.vmem [#allocation2], %s271
          %s274 = ssub.s32 1024, 1024
          %275 = vsyncadd %s269, %s274
          %s276 = smul.addr %s33, 32
          %s277 = sadd.s32 %s34, %s276
          %s278 = smul.addr %s277, 128
          %s279 = scalar_lea.hbm %s0, %s278
          %s280 = sshll.u32 %s272, 4
          %s281 = int_to_ptr.vmem [resolvable:$true] %s280
          %286 = dma.hbm_to_vmem [thread:$0]  %s279, 1024, %s281, %s269, 512, 128, 8
        $region36: #{tpu_custom_call.1} parent=31 // pred_fallthru
          _
        // Predicated region
        $region37: #{tpu_custom_call.1} parent=31 // pred_check
          %p287 = pneg %p88
        $region38: #{tpu_custom_call.1} parent=31 // pred_check_branch
          %289 = sbr.rel (%p287) target = $region40
        $region39: #{tpu_custom_call.1} parent=31 // pred_region
          %s290 = sand.u32 %s78, 1
          %s291 = scalar_lea.sflag [#allocation6], %s290
          %s292 = sand.u32 %s78, 1
          %s293 = smul.addr %s292, 64
          %s294 = scalar_lea.vmem [#allocation5], %s293
          %s296 = ssub.s32 1024, 1024
          %297 = vsyncadd %s291, %s296
          %s298 = smul.addr %s33, 32
          %s299 = sadd.s32 %s34, %s298
          %s300 = smul.addr %s299, 128
          %s301 = scalar_lea.hbm %s1, %s300
          %s302 = sshll.u32 %s294, 4
          %s303 = int_to_ptr.vmem [resolvable:$true] %s302
          %308 = dma.hbm_to_vmem [thread:$0]  %s301, 1024, %s303, %s291, 512, 128, 8
        $region40: #{tpu_custom_call.1} parent=31 // pred_fallthru
          _
      $region32: #{tpu_custom_call.1} parent=5 // pred_fallthru
        _
      %p309 = scmp.le.s32.totalorder 1, %s26
      %p310 = scmp.lt.s32.totalorder %s26, 9
      %p311 = pnand %p309, %p310
      %p312 = pneg %p311
      // Predicated region
      $region41: #{tpu_custom_call.1} parent=5 // pred_check
        _
      $region42: #{tpu_custom_call.1} parent=5 // pred_check_branch
        %314 = sbr.rel (%p311) target = $region44
      $region43: #{tpu_custom_call.1} parent=5 // pred_region
        %s315 = ssub.s32 %s26, 1
        %s316 = sand.u32 %s53, 1
        %s317 = scalar_lea.sflag [#allocation3], %s316
        %s318 = sand.u32 %s53, 1
        %s319 = smul.addr %s318, 64
        %s320 = scalar_lea.vmem [#allocation2], %s319
        // Predicated region
        $region45: #{tpu_custom_call.1} parent=43 // pred_check
          %p321 = pneg %p66
        $region46: #{tpu_custom_call.1} parent=43 // pred_check_branch
          %323 = sbr.rel (%p321) target = $region48
        $region47: #{tpu_custom_call.1} parent=43 // pred_region
          %324 = dma.done %s317, 1024
        $region48: #{tpu_custom_call.1} parent=43 // pred_fallthru
          _
        %s325 = sand.u32 %s81, 1
        %s326 = scalar_lea.sflag [#allocation6], %s325
        %s327 = sand.u32 %s81, 1
        %s328 = smul.addr %s327, 64
        %s329 = scalar_lea.vmem [#allocation5], %s328
        // Predicated region
        $region49: #{tpu_custom_call.1} parent=43 // pred_check
          %p330 = pneg %p94
        $region50: #{tpu_custom_call.1} parent=43 // pred_check_branch
          %332 = sbr.rel (%p330) target = $region52
        $region51: #{tpu_custom_call.1} parent=43 // pred_region
          %333 = dma.done %s326, 1024
        $region52: #{tpu_custom_call.1} parent=43 // pred_fallthru
          _
        %s334 = sand.u32 %s53, 1
        %s335 = scalar_lea.sflag [#allocation3], %s334
        %s336 = sand.u32 %s53, 1
        %s337 = smul.addr %s336, 64
        %s338 = scalar_lea.vmem [#allocation2], %s337
        %p339 = pneg %p66
        %p340 = pneg %p63
        %s341 = sand.u32 %s81, 1
        %s342 = scalar_lea.sflag [#allocation6], %s341
        %s343 = sand.u32 %s81, 1
        %s344 = smul.addr %s343, 64
        %s345 = scalar_lea.vmem [#allocation5], %s344
        %p346 = pneg %p94
        %p347 = pneg %p91
        %p348 = pneg %p115
        %p349 = pneg %p112
        %p350 = pneg %p136
        %p351 = pneg %p133
        %p352 = pneg %p157
        %p353 = pneg %p154
        %p354 = pneg %p178
        %p355 = pneg %p175
        %p356 = pneg %p206
        %p357 = pneg %p203
        %s358 = sand.u32 %s193, 1
        %s359 = scalar_lea.sflag [#allocation4], %s358
        %s360 = sand.u32 %s193, 1
        %s361 = smul.addr %s360, 32
        %s362 = scalar_lea.vmem [#allocation7], %s361
        %p363 = pneg %p234
        %p364 = pneg %p231
        %s365 = sand.u32 %s221, 1
        %s366 = scalar_lea.sflag [#allocation9], %s365
        %s367 = sand.u32 %s221, 1
        %s368 = smul.addr %s367, 32
        %s369 = scalar_lea.vmem [#allocation8], %s368
        %v371 = vld [vmem:[%s320] sm:$0xff]
        %v372 = vld [vmem:[%s320 + $0x8] sm:$0xff]
        %v373 = vld [vmem:[%s320 + $0x10] sm:$0xff]
        %v374 = vld [vmem:[%s320 + $0x18] sm:$0xff]
        %v375 = vld [vmem:[%s320 + $0x20] sm:$0xff]
        %v376 = vld [vmem:[%s320 + $0x28] sm:$0xff]
        %v377 = vld [vmem:[%s320 + $0x30] sm:$0xff]
        %v378 = vld [vmem:[%s320 + $0x38] sm:$0xff]
        %v379 = vpack.c.bf16 %v372, %v371
        %v380 = vpack.c.bf16 %v374, %v373
        %v381 = vpack.c.bf16 %v376, %v375
        %v382 = vpack.c.bf16 %v378, %v377
        %v383 = vld [vmem:[%s329] sm:$0xff]
        %v384 = vld [vmem:[%s329 + $0x8] sm:$0xff]
        %v385 = vld [vmem:[%s329 + $0x10] sm:$0xff]
        %v386 = vld [vmem:[%s329 + $0x18] sm:$0xff]
        %v387 = vld [vmem:[%s329 + $0x20] sm:$0xff]
        %v388 = vld [vmem:[%s329 + $0x28] sm:$0xff]
        %v389 = vld [vmem:[%s329 + $0x30] sm:$0xff]
        %v390 = vld [vmem:[%s329 + $0x38] sm:$0xff]
        %v391 = vpack.c.bf16 %v384, %v383
        %v392 = vpack.c.bf16 %v386, %v385
        %v393 = vpack.c.bf16 %v388, %v387
        %v394 = vpack.c.bf16 %v390, %v389
        %v395 = vld [vmem:[%s2] sm:$0xf]
        %v396 = vld [vmem:[%s2 + $0x4] sm:$0xf]
        %v397 = vld [vmem:[%s2 + $0x8] sm:$0xf]
        %v398 = vld [vmem:[%s2 + $0xc] sm:$0xf]
        %v399 = vld [vmem:[%s2 + $0x10] sm:$0xf]
        %v400 = vld [vmem:[%s2 + $0x14] sm:$0xf]
        %v401 = vld [vmem:[%s2 + $0x18] sm:$0xf]
        %v402 = vld [vmem:[%s2 + $0x1c] sm:$0xf]
        %v403 = vld [vmem:[%s3] sm:$0xff]
        %v404 = vld [vmem:[%s3 + $0x8] sm:$0xff]
        %v405 = vld [vmem:[%s3 + $0x10] sm:$0xff]
        %v406 = vld [vmem:[%s3 + $0x18] sm:$0xff]
        %v407 = vld [vmem:[%s3 + $0x20] sm:$0xff]
        %v408 = vld [vmem:[%s3 + $0x28] sm:$0xff]
        %v409 = vld [vmem:[%s3 + $0x30] sm:$0xff]
        %v410 = vld [vmem:[%s3 + $0x38] sm:$0xff]
        %412 = vset.pattern.permute.xlu0 0
        %413 = vperm.xlu0 %412, %v403
        %v414 = vpop.permute.xlu0 %413
        %417 = vset.pattern.permute.xlu0 0
        %418 = vperm.xlu0 %417, %v404
        %v419 = vpop.permute.xlu0 %418
        %422 = vset.pattern.permute.xlu0 0
        %423 = vperm.xlu0 %422, %v405
        %v424 = vpop.permute.xlu0 %423
        %427 = vset.pattern.permute.xlu0 0
        %428 = vperm.xlu0 %427, %v406
        %v429 = vpop.permute.xlu0 %428
        %432 = vset.pattern.permute.xlu0 0
        %433 = vperm.xlu0 %432, %v407
        %v434 = vpop.permute.xlu0 %433
        %437 = vset.pattern.permute.xlu0 0
        %438 = vperm.xlu0 %437, %v408
        %v439 = vpop.permute.xlu0 %438
        %442 = vset.pattern.permute.xlu0 0
        %443 = vperm.xlu0 %442, %v409
        %v444 = vpop.permute.xlu0 %443
        %447 = vset.pattern.permute.xlu0 0
        %448 = vperm.xlu0 %447, %v410
        %v449 = vpop.permute.xlu0 %448
        %v459 = vunpack.c.l.b16 %v395
        %v460 = vunpack.c.l.b16 %v396
        %v461 = vunpack.c.l.b16 %v397
        %v462 = vunpack.c.l.b16 %v398
        %v463 = vunpack.c.l.b16 %v399
        %v464 = vunpack.c.l.b16 %v400
        %v465 = vunpack.c.l.b16 %v401
        %v466 = vunpack.c.l.b16 %v402
        %v467 = vpack.c.b16 %v460, %v459
        %v468 = vpack.c.b16 %v462, %v461
        %v469 = vpack.c.b16 %v464, %v463
        %v470 = vpack.c.b16 %v466, %v465
        %vm471 = vcmask 523264
        %v473 = vsel %vm471, %v467, 0
        %v476 = vsel %vm471, %v468, 0
        %v479 = vsel %vm471, %v469, 0
        %v482 = vsel %vm471, %v470, 0
        %484 = vmatprep.subr.bf16.mxu0 0
        %485 = vmatpush1.bf16.msra.mxu0 %v379
        %486 = vmatprep.subr.bf16.mxu0 0
        %487 = vmatpush1.bf16.msra.mxu0 %v380
        %488 = vmatprep.subr.bf16.mxu0 0
        %489 = vmatpush1.bf16.msra.mxu0 %v381
        %490 = vmatprep.subr.bf16.mxu0 0
        %491 = vmatpush1.bf16.msra.mxu0 %v382
        %492 = vmatprep.subr.bf16.mxu0 0
        %493 = vmatpush1.bf16.msra.mxu0 0
        %494 = vmatprep.subr.bf16.mxu0 0
        %495 = vmatpush1.bf16.msra.mxu0 0
        %496 = vmatprep.subr.bf16.mxu0 0
        %497 = vmatpush1.bf16.msra.mxu0 0
        %498 = vmatprep.subr.bf16.mxu0 0
        %499 = vmatpush1.bf16.msra.mxu0 0
        %500 = vmatprep.subr.bf16.mxu0 0
        %501 = vmatpush1.bf16.msra.mxu0 0
        %502 = vmatprep.subr.bf16.mxu0 0
        %503 = vmatpush1.bf16.msra.mxu0 0
        %504 = vmatprep.subr.bf16.mxu0 0
        %505 = vmatpush1.bf16.msra.mxu0 0
        %506 = vmatprep.subr.bf16.mxu0 0
        %507 = vmatpush1.bf16.msra.mxu0 0
        %508 = vmatprep.subr.bf16.mxu0 0
        %509 = vmatpush1.bf16.msra.mxu0 0
        %510 = vmatprep.subr.bf16.mxu0 0
        %511 = vmatpush1.bf16.msra.mxu0 0
        %512 = vmatprep.subr.bf16.mxu0 0
        %513 = vmatpush1.bf16.msra.mxu0 0
        %514 = vmatprep.subr.bf16.mxu0 0
        %515 = vmatpush1.bf16.msra.mxu0 0
        %516 = vmatprep.mubr.bf16.mxu0 0
        %517 = vmatmul.mubr.bf16.gmra.mrb[0].mxu0 %v473
        %v518 = vpop.f32.mrb[0].mxu0
        %v519 = vadd.f32 %v414, %v518
        %v520 = vpop.f32.mrb[0].mxu0
        %v521 = vpop.f32.mrb[0].mxu0
        %v522 = vadd.f32 %v419, %v521
        %v523 = vpop.f32.mrb[0].mxu0
        %524 = vmatprep.mubr.bf16.mxu0 0
        %525 = vmatmul.mubr.bf16.gmra.mrb[0].mxu0 %v476
        %v526 = vpop.f32.mrb[0].mxu0
        %v527 = vadd.f32 %v424, %v526
        %v528 = vpop.f32.mrb[0].mxu0
        %v529 = vpop.f32.mrb[0].mxu0
        %v530 = vadd.f32 %v429, %v529
        %v531 = vpop.f32.mrb[0].mxu0
        %532 = vmatprep.mubr.bf16.mxu0 0
        %533 = vmatmul.mubr.bf16.gmra.mrb[0].mxu0 %v479
        %v534 = vpop.f32.mrb[0].mxu0
        %v535 = vadd.f32 %v434, %v534
        %v536 = vpop.f32.mrb[0].mxu0
        %v537 = vpop.f32.mrb[0].mxu0
        %v538 = vadd.f32 %v439, %v537
        %v539 = vpop.f32.mrb[0].mxu0
        %540 = vmatprep.mubr.bf16.mxu0 0
        %541 = vmatmul.mubr.bf16.gmra.mrb[0].mxu0 %v482
        %v542 = vpop.f32.mrb[0].mxu0
        %v543 = vadd.f32 %v444, %v542
        %v544 = vpop.f32.mrb[0].mxu0
        %v545 = vpop.f32.mrb[0].mxu0
        %v546 = vadd.f32 %v449, %v545
        %v547 = vpop.f32.mrb[0].mxu0
        %548 = vdwg.mxu0
        %v549 = vld [vmem:[%s4] sm:$0xf]
        %v550 = vld [vmem:[%s4 + $0x4] sm:$0xf]
        %v551 = vld [vmem:[%s4 + $0x8] sm:$0xf]
        %v552 = vld [vmem:[%s4 + $0xc] sm:$0xf]
        %v553 = vld [vmem:[%s4 + $0x10] sm:$0xf]
        %v554 = vld [vmem:[%s4 + $0x14] sm:$0xf]
        %v555 = vld [vmem:[%s4 + $0x18] sm:$0xf]
        %v556 = vld [vmem:[%s4 + $0x1c] sm:$0xf]
        %v557 = vld [vmem:[%s5] sm:$0xff]
        %v558 = vld [vmem:[%s5 + $0x8] sm:$0xff]
        %v559 = vld [vmem:[%s5 + $0x10] sm:$0xff]
        %v560 = vld [vmem:[%s5 + $0x18] sm:$0xff]
        %v561 = vld [vmem:[%s5 + $0x20] sm:$0xff]
        %v562 = vld [vmem:[%s5 + $0x28] sm:$0xff]
        %v563 = vld [vmem:[%s5 + $0x30] sm:$0xff]
        %v564 = vld [vmem:[%s5 + $0x38] sm:$0xff]
        %566 = vset.pattern.permute.xlu0 0
        %567 = vperm.xlu0 %566, %v557
        %v568 = vpop.permute.xlu0 %567
        %571 = vset.pattern.permute.xlu0 0
        %572 = vperm.xlu0 %571, %v558
        %v573 = vpop.permute.xlu0 %572
        %576 = vset.pattern.permute.xlu0 0
        %577 = vperm.xlu0 %576, %v559
        %v578 = vpop.permute.xlu0 %577
        %581 = vset.pattern.permute.xlu0 0
        %582 = vperm.xlu0 %581, %v560
        %v583 = vpop.permute.xlu0 %582
        %586 = vset.pattern.permute.xlu0 0
        %587 = vperm.xlu0 %586, %v561
        %v588 = vpop.permute.xlu0 %587
        %591 = vset.pattern.permute.xlu0 0
        %592 = vperm.xlu0 %591, %v562
        %v593 = vpop.permute.xlu0 %592
        %596 = vset.pattern.permute.xlu0 0
        %597 = vperm.xlu0 %596, %v563
        %v598 = vpop.permute.xlu0 %597
        %601 = vset.pattern.permute.xlu0 0
        %602 = vperm.xlu0 %601, %v564
        %v603 = vpop.permute.xlu0 %602
        %v613 = vunpack.c.l.b16 %v549
        %v614 = vunpack.c.l.b16 %v550
        %v615 = vunpack.c.l.b16 %v551
        %v616 = vunpack.c.l.b16 %v552
        %v617 = vunpack.c.l.b16 %v553
        %v618 = vunpack.c.l.b16 %v554
        %v619 = vunpack.c.l.b16 %v555
        %v620 = vunpack.c.l.b16 %v556
        %v621 = vpack.c.b16 %v614, %v613
        %v622 = vpack.c.b16 %v616, %v615
        %v623 = vpack.c.b16 %v618, %v617
        %v624 = vpack.c.b16 %v620, %v619
        %v626 = vsel %vm471, %v621, 0
        %v629 = vsel %vm471, %v622, 0
        %v632 = vsel %vm471, %v623, 0
        %v635 = vsel %vm471, %v624, 0
        %637 = vmatprep.subr.bf16.mxu0 0
        %638 = vmatpush1.bf16.msra.mxu0 %v391
        %639 = vmatprep.subr.bf16.mxu0 0
        %640 = vmatpush1.bf16.msra.mxu0 %v392
        %641 = vmatprep.subr.bf16.mxu0 0
        %642 = vmatpush1.bf16.msra.mxu0 %v393
        %643 = vmatprep.subr.bf16.mxu0 0
        %644 = vmatpush1.bf16.msra.mxu0 %v394
        %645 = vmatprep.subr.bf16.mxu0 0
        %646 = vmatpush1.bf16.msra.mxu0 0
        %647 = vmatprep.subr.bf16.mxu0 0
        %648 = vmatpush1.bf16.msra.mxu0 0
        %649 = vmatprep.subr.bf16.mxu0 0
        %650 = vmatpush1.bf16.msra.mxu0 0
        %651 = vmatprep.subr.bf16.mxu0 0
        %652 = vmatpush1.bf16.msra.mxu0 0
        %653 = vmatprep.subr.bf16.mxu0 0
        %654 = vmatpush1.bf16.msra.mxu0 0
        %655 = vmatprep.subr.bf16.mxu0 0
        %656 = vmatpush1.bf16.msra.mxu0 0
        %657 = vmatprep.subr.bf16.mxu0 0
        %658 = vmatpush1.bf16.msra.mxu0 0
        %659 = vmatprep.subr.bf16.mxu0 0
        %660 = vmatpush1.bf16.msra.mxu0 0
        %661 = vmatprep.subr.bf16.mxu0 0
        %662 = vmatpush1.bf16.msra.mxu0 0
        %663 = vmatprep.subr.bf16.mxu0 0
        %664 = vmatpush1.bf16.msra.mxu0 0
        %665 = vmatprep.subr.bf16.mxu0 0
        %666 = vmatpush1.bf16.msra.mxu0 0
        %667 = vmatprep.subr.bf16.mxu0 0
        %668 = vmatpush1.bf16.msra.mxu0 0
        %669 = vmatprep.mubr.bf16.mxu0 0
        %670 = vmatmul.mubr.bf16.gmra.mrb[0].mxu0 %v626
        %v671 = vpop.f32.mrb[0].mxu0
        %v672 = vadd.f32 %v568, %v671
        %v673 = vpop.f32.mrb[0].mxu0
        %v674 = vpop.f32.mrb[0].mxu0
        %v675 = vadd.f32 %v573, %v674
        %v676 = vpop.f32.mrb[0].mxu0
        %677 = vmatprep.mubr.bf16.mxu0 0
        %678 = vmatmul.mubr.bf16.gmra.mrb[0].mxu0 %v629
        %v679 = vpop.f32.mrb[0].mxu0
        %v680 = vadd.f32 %v578, %v679
        %v681 = vpop.f32.mrb[0].mxu0
        %v682 = vpop.f32.mrb[0].mxu0
        %v683 = vadd.f32 %v583, %v682
        %v684 = vpop.f32.mrb[0].mxu0
        %685 = vmatprep.mubr.bf16.mxu0 0
        %686 = vmatmul.mubr.bf16.gmra.mrb[0].mxu0 %v632
        %v687 = vpop.f32.mrb[0].mxu0
        %v688 = vadd.f32 %v588, %v687
        %v689 = vpop.f32.mrb[0].mxu0
        %v690 = vpop.f32.mrb[0].mxu0
        %v691 = vadd.f32 %v593, %v690
        %v692 = vpop.f32.mrb[0].mxu0
        %693 = vmatprep.mubr.bf16.mxu0 0
        %694 = vmatmul.mubr.bf16.gmra.mrb[0].mxu0 %v635
        %v695 = vpop.f32.mrb[0].mxu0
        %v696 = vadd.f32 %v598, %v695
        %v697 = vpop.f32.mrb[0].mxu0
        %v698 = vpop.f32.mrb[0].mxu0
        %v699 = vadd.f32 %v603, %v698
        %v700 = vpop.f32.mrb[0].mxu0
        %701 = vdwg.mxu0
        %v702 = vpack.c.bf16 %v522, %v519
        %v703 = vpack.c.bf16 %v530, %v527
        %v704 = vpack.c.bf16 %v538, %v535
        %v705 = vpack.c.bf16 %v546, %v543
        %v710 = vunpack.c.l.b16 %v702
        %v711 = vunpack.c.h.b16 %v702
        %v712 = vunpack.c.l.b16 %v703
        %v713 = vunpack.c.h.b16 %v703
        %v714 = vunpack.c.l.b16 %v704
        %v715 = vunpack.c.h.b16 %v704
        %v716 = vunpack.c.l.b16 %v705
        %v717 = vunpack.c.h.b16 %v705
        %v718 = vpack.c.b16 %v710, %v710
        %v719 = vpack.c.b16 %v711, %v711
        %v720 = vpack.c.b16 %v712, %v712
        %v721 = vpack.c.b16 %v713, %v713
        %v722 = vpack.c.b16 %v714, %v714
        %v723 = vpack.c.b16 %v715, %v715
        %v724 = vpack.c.b16 %v716, %v716
        %v725 = vpack.c.b16 %v717, %v717
        %734 = vst [vmem:[%s362] sm:$0xf] %v718
        %735 = vst [vmem:[%s362 + $0x4] sm:$0xf] %v719
        %736 = vst [vmem:[%s362 + $0x8] sm:$0xf] %v720
        %737 = vst [vmem:[%s362 + $0xc] sm:$0xf] %v721
        %738 = vst [vmem:[%s362 + $0x10] sm:$0xf] %v722
        %739 = vst [vmem:[%s362 + $0x14] sm:$0xf] %v723
        %740 = vst [vmem:[%s362 + $0x18] sm:$0xf] %v724
        %741 = vst [vmem:[%s362 + $0x1c] sm:$0xf] %v725
        %v742 = vpack.c.bf16 %v675, %v672
        %v743 = vpack.c.bf16 %v683, %v680
        %v744 = vpack.c.bf16 %v691, %v688
        %v745 = vpack.c.bf16 %v699, %v696
        %v750 = vunpack.c.l.b16 %v742
        %v751 = vunpack.c.h.b16 %v742
        %v752 = vunpack.c.l.b16 %v743
        %v753 = vunpack.c.h.b16 %v743
        %v754 = vunpack.c.l.b16 %v744
        %v755 = vunpack.c.h.b16 %v744
        %v756 = vunpack.c.l.b16 %v745
        %v757 = vunpack.c.h.b16 %v745
        %v758 = vpack.c.b16 %v750, %v750
        %v759 = vpack.c.b16 %v751, %v751
        %v760 = vpack.c.b16 %v752, %v752
        %v761 = vpack.c.b16 %v753, %v753
        %v762 = vpack.c.b16 %v754, %v754
        %v763 = vpack.c.b16 %v755, %v755
        %v764 = vpack.c.b16 %v756, %v756
        %v765 = vpack.c.b16 %v757, %v757
        %774 = vst [vmem:[%s369] sm:$0xf] %v758
        %775 = vst [vmem:[%s369 + $0x4] sm:$0xf] %v759
        %776 = vst [vmem:[%s369 + $0x8] sm:$0xf] %v760
        %777 = vst [vmem:[%s369 + $0xc] sm:$0xf] %v761
        %778 = vst [vmem:[%s369 + $0x10] sm:$0xf] %v762
        %779 = vst [vmem:[%s369 + $0x14] sm:$0xf] %v763
        %780 = vst [vmem:[%s369 + $0x18] sm:$0xf] %v764
        %781 = vst [vmem:[%s369 + $0x1c] sm:$0xf] %v765
        %s782 = sand.u32 %s193, 1
        %s783 = scalar_lea.sflag [#allocation4], %s782
        %s784 = sand.u32 %s193, 1
        %s785 = smul.addr %s784, 32
        %s786 = scalar_lea.vmem [#allocation7], %s785
        %s787 = sand.u32 %s221, 1
        %s788 = scalar_lea.sflag [#allocation9], %s787
        %s789 = sand.u32 %s221, 1
        %s790 = smul.addr %s789, 32
        %s791 = scalar_lea.vmem [#allocation8], %s790
        // Predicated region
        $region53: #{tpu_custom_call.1} parent=43 // pred_check
          %p792 = pneg %p203
        $region54: #{tpu_custom_call.1} parent=43 // pred_check_branch
          %794 = sbr.rel (%p792) target = $region56
        $region55: #{tpu_custom_call.1} parent=43 // pred_region
          %s796 = ssub.s32 512, 512
          %797 = vsyncadd %s783, %s796
          %s798 = smul.addr %s35, 32
          %s799 = sadd.s32 %s36, %s798
          %s800 = smul.addr %s799, 64
          %s801 = scalar_lea.hbm %s6, %s800
          %s802 = sshll.u32 %s786, 4
          %s803 = int_to_ptr.vmem [resolvable:$true] %s802
          %808 = dma.vmem_to_hbm [thread:$0]  %s803, 512, %s801, %s783, 64, 256, 4
        $region56: #{tpu_custom_call.1} parent=43 // pred_fallthru
          _
        // Predicated region
        $region57: #{tpu_custom_call.1} parent=43 // pred_check
          %p809 = pneg %p231
        $region58: #{tpu_custom_call.1} parent=43 // pred_check_branch
          %811 = sbr.rel (%p809) target = $region60
        $region59: #{tpu_custom_call.1} parent=43 // pred_region
          %s813 = ssub.s32 512, 512
          %814 = vsyncadd %s788, %s813
          %s815 = smul.addr %s35, 32
          %s816 = sadd.s32 %s36, %s815
          %s817 = smul.addr %s816, 64
          %s818 = scalar_lea.hbm %s7, %s817
          %s819 = sshll.u32 %s791, 4
          %s820 = int_to_ptr.vmem [resolvable:$true] %s819
          %825 = dma.vmem_to_hbm [thread:$0]  %s820, 512, %s818, %s788, 64, 256, 4
        $region60: #{tpu_custom_call.1} parent=43 // pred_fallthru
          _
      $region44: #{tpu_custom_call.1} parent=5 // pred_fallthru
        _
      %p826 = scmp.le.s32.totalorder 2, %s26
      // Predicated region
      $region61: #{tpu_custom_call.1} parent=5 // pred_check
        %p827 = pneg %p826
      $region62: #{tpu_custom_call.1} parent=5 // pred_check_branch
        %829 = sbr.rel (%p827) target = $region64
      $region63: #{tpu_custom_call.1} parent=5 // pred_region
        %s830 = ssub.s32 %s26, 2
        // Predicated region
        $region65: #{tpu_custom_call.1} parent=63 // pred_check
          %p831 = pneg %p209
        $region66: #{tpu_custom_call.1} parent=63 // pred_check_branch
          %833 = sbr.rel (%p831) target = $region68
        $region67: #{tpu_custom_call.1} parent=63 // pred_region
          %s834 = sand.u32 %s194, 1
          %s835 = scalar_lea.sflag [#allocation4], %s834
          %s836 = sand.u32 %s194, 1
          %s837 = smul.addr %s836, 32
          %s838 = scalar_lea.vmem [#allocation7], %s837
          %839 = dma.done %s835, 512
        $region68: #{tpu_custom_call.1} parent=63 // pred_fallthru
          _
        // Predicated region
        $region69: #{tpu_custom_call.1} parent=63 // pred_check
          %p840 = pneg %p237
        $region70: #{tpu_custom_call.1} parent=63 // pred_check_branch
          %842 = sbr.rel (%p840) target = $region72
        $region71: #{tpu_custom_call.1} parent=63 // pred_region
          %s843 = sand.u32 %s222, 1
          %s844 = scalar_lea.sflag [#allocation9], %s843
          %s845 = sand.u32 %s222, 1
          %s846 = smul.addr %s845, 32
          %s847 = scalar_lea.vmem [#allocation8], %s846
          %848 = dma.done %s844, 512
        $region72: #{tpu_custom_call.1} parent=63 // pred_fallthru
          _
      $region64: #{tpu_custom_call.1} parent=5 // pred_fallthru
        _
    $region6: #{tpu_custom_call.1} parent=1 // loop_footer
      %s30 = sadd.s32 1, %s26
    $region7: #{tpu_custom_call.1} parent=1 // loop_footer_branch
      %25 = sbr.rel target = $region3
    $region8: #{tpu_custom_call.1} parent=1 // loop_exit
      _
    %849 = vsyncpa [#allocation3], 1
    %s850 = scalar_lea.sflag [#allocation3], 1
    %851 = vsyncpa %s850, 1
    %852 = vsyncpa [#allocation6], 1
    %s853 = scalar_lea.sflag [#allocation6], 1
    %854 = vsyncpa %s853, 1
    %855 = vsyncpa [#allocation4], 1
    %s856 = scalar_lea.sflag [#allocation4], 1
    %857 = vsyncpa %s856, 1
    %858 = vsyncpa [#allocation9], 1
    %s859 = scalar_lea.sflag [#allocation9], 1
    %860 = vsyncpa %s859, 1

</llo_original>
